<compile_context>
chip_gen: v7x
topology: tpu7x:2x2x1
jax: 0.10.0
libtpu: 0.0.40
codegen_flags: <defaults>
</compile_context>

<pallas_src>
import jax
import jax.numpy as jnp
from jax.experimental import pallas as pl
from jax.experimental.pallas import tpu as pltpu

HIDDEN = 1024
LANE = 128


def mlp_kernel(x_ref, w1_ref, b1_ref, w2_ref, b2_ref, o_ref):
    # First linear: bf16 x bf16 -> f32 accumulation on the MXU.
    h = jnp.dot(x_ref[...], w1_ref[...], preferred_element_type=jnp.float32)
    # Bias add + tanh in f32 (tanh lowers to the EUP — separate bundle slot).
    h = jnp.tanh(h + b1_ref[...])
    # Downcast the largest live intermediate before the second matmul.
    h = h.astype(jnp.bfloat16)
    # Second linear (lane-padded output width), f32 accumulation + bias.
    out = jnp.dot(h, w2_ref[...], preferred_element_type=jnp.float32) + b2_ref[...]
    o_ref[...] = out.astype(o_ref.dtype)


def camera2d_calibration_nn(x, w1, b1, w2, b2, *, block_m=None):
    """Pallas implementation of Camera2DCalibrationNN.forward.

    x : (B, input_size)
    w1: (input_size, HIDDEN), b1: (HIDDEN,) or (1, HIDDEN)
    w2: (HIDDEN, output_size), b2: (output_size,) or (1, output_size)
    Returns logits: (B, output_size) float32.
    """
    B, in_sz = x.shape
    out_sz = w2.shape[1]

    b1 = jnp.asarray(b1, jnp.float32).reshape(1, HIDDEN)
    b2 = jnp.asarray(b2, jnp.float32).reshape(1, out_sz)

    # --- batch tiling -------------------------------------------------------
    # Cap the batch tile at 256: (bm, HIDDEN) f32 hidden activation is the
    # largest live intermediate; bm <= 256 keeps it well inside scoped VMEM on
    # all chips while amortizing the ~0.35 us per-grid-step overhead. Pad the
    # batch rather than asserting divisibility.
    bm = 256 if block_m is None else block_m
    bm = max(8, min(bm, pl.cdiv(B, 8) * 8))
    B_pad = pl.cdiv(B, bm) * bm

    # --- lane-dense output --------------------------------------------------
    out_pad = pl.cdiv(out_sz, LANE) * LANE

    # --- bf16 storage + zero-padding ----------------------------------------
    x_p = x.astype(jnp.bfloat16)
    if B_pad != B:
        x_p = jnp.pad(x_p, ((0, B_pad - B), (0, 0)))
    w1_p = w1.astype(jnp.bfloat16)
    w2_p = jnp.pad(w2.astype(jnp.bfloat16), ((0, 0), (0, out_pad - out_sz)))
    b2_p = jnp.pad(b2, ((0, 0), (0, out_pad - out_sz)))

    grid = (B_pad // bm,)

    # Constant-index operands never change across grid steps -> single buffer.
    resident = pl.Buffered(1)

    cost = pl.CostEstimate(
        flops=2 * B_pad * in_sz * HIDDEN + 2 * B_pad * HIDDEN * out_pad,
        transcendentals=B_pad * HIDDEN,
        bytes_accessed=(B_pad * in_sz * 2              # x (bf16)
                        + in_sz * HIDDEN * 2           # w1 (bf16)
                        + HIDDEN * out_pad * 2         # w2 (bf16)
                        + (HIDDEN + out_pad) * 4       # biases (f32)
                        + B_pad * out_pad * 4),        # output (f32)
    )

    out = pl.pallas_call(
        mlp_kernel,
        out_shape=jax.ShapeDtypeStruct((B_pad, out_pad), jnp.float32),
        grid_spec=pltpu.PrefetchScalarGridSpec(
            num_scalar_prefetch=0,
            grid=grid,
            in_specs=[
                pl.BlockSpec((bm, in_sz), lambda i: (i, 0)),            # x tile
                pl.BlockSpec((in_sz, HIDDEN), lambda i: (0, 0),
                             pipeline_mode=resident),                   # w1 (resident)
                pl.BlockSpec((1, HIDDEN), lambda i: (0, 0),
                             pipeline_mode=resident),                   # b1
                pl.BlockSpec((HIDDEN, out_pad), lambda i: (0, 0),
                             pipeline_mode=resident),                   # w2 (resident)
                pl.BlockSpec((1, out_pad), lambda i: (0, 0),
                             pipeline_mode=resident),                   # b2
            ],
            out_specs=pl.BlockSpec((bm, out_pad), lambda i: (i, 0)),
        ),
        compiler_params=pltpu.CompilerParams(
            dimension_semantics=("parallel",),
        ),
        cost_estimate=cost,
    )(x_p, w1_p, b1, w2_p, b2_p)

    # Slice away batch padding and the lane padding of the output features.
    return out[:B, :out_sz]


def reference_forward(x, w1, b1, w2, b2):
    # Pure-JAX reference mirroring the kernel's bf16 storage / f32 accumulation.
    xb = x.astype(jnp.bfloat16).astype(jnp.float32)
    w1b = w1.astype(jnp.bfloat16).astype(jnp.float32)
    w2b = w2.astype(jnp.bfloat16).astype(jnp.float32)
    h = jnp.tanh(xb @ w1b + b1.reshape(1, -1))
    hb = h.astype(jnp.bfloat16).astype(jnp.float32)
    return hb @ w2b + b2.reshape(1, -1)


if __name__ == "__main__":
    # Small shapes consistent with the module: batch=8, input_size=32, output_size=16.
    B, INPUT_SIZE, OUTPUT_SIZE = 8, 32, 16

    key = jax.random.PRNGKey(0)
    k_x, k_w1, k_b1, k_w2, k_b2 = jax.random.split(key, 5)

    x = jax.random.normal(k_x, (B, INPUT_SIZE), dtype=jnp.float32)

    # Deterministic parameter init (uniform, roughly matching torch.nn.Linear scale).
    lim1 = 1.0 / (INPUT_SIZE ** 0.5)
    lim2 = 1.0 / (HIDDEN ** 0.5)
    w1 = jax.random.uniform(k_w1, (INPUT_SIZE, HIDDEN), jnp.float32, -lim1, lim1)
    b1 = jax.random.uniform(k_b1, (1, HIDDEN), jnp.float32, -lim1, lim1)
    w2 = jax.random.uniform(k_w2, (HIDDEN, OUTPUT_SIZE), jnp.float32, -lim2, lim2)
    b2 = jax.random.uniform(k_b2, (1, OUTPUT_SIZE), jnp.float32, -lim2, lim2)

    logits = camera2d_calibration_nn(x, w1, b1, w2, b2)
    jax.block_until_ready(logits)

    ref = reference_forward(x, w1, b1, w2, b2)
    assert logits.shape == (B, OUTPUT_SIZE)
    max_err = float(jnp.max(jnp.abs(logits - ref)))
    assert jnp.allclose(logits, ref, atol=2e-2, rtol=2e-2), max_err

    print("KERNEL_OK")
</pallas_src>

<mosaic_0001>
module attributes {stable_mosaic.version = 11 : i64} {
  func.func @mlp_kernel(%arg0: i32, %arg1: memref<8x32xbf16, #tpu.memory_space<vmem>>, %arg2: memref<32x1024xbf16, #tpu.memory_space<vmem>>, %arg3: memref<1x1024xf32, #tpu.memory_space<vmem>>, %arg4: memref<1024x128xbf16, #tpu.memory_space<vmem>>, %arg5: memref<1x128xf32, #tpu.memory_space<vmem>>, %arg6: memref<8x128xf32, #tpu.memory_space<vmem>>) attributes {dimension_semantics = [#tpu.dimension_semantics<parallel>], iteration_bounds = array<i64: 1>, scalar_prefetch = 0 : i64, scratch_operands = 0 : i64, tpu.core_type = #tpu.core_type<tc>, window_params = [{transform_indices = @transform_0, window_bounds = array<i64: 8, 32>}, {pipeline_mode = #tpu.pipeline_mode<synchronous>, transform_indices = @transform_1, window_bounds = array<i64: 32, 1024>}, {pipeline_mode = #tpu.pipeline_mode<synchronous>, transform_indices = @transform_2, window_bounds = array<i64: 1, 1024>}, {pipeline_mode = #tpu.pipeline_mode<synchronous>, transform_indices = @transform_3, window_bounds = array<i64: 1024, 128>}, {pipeline_mode = #tpu.pipeline_mode<synchronous>, transform_indices = @transform_4, window_bounds = array<i64: 1, 128>}, {transform_indices = @transform_5, window_bounds = array<i64: 8, 128>}]} {
    %c0 = arith.constant 0 : index
    %c0_0 = arith.constant 0 : index
    %0 = vector.load %arg1[%c0, %c0_0] : memref<8x32xbf16, #tpu.memory_space<vmem>>, vector<8x32xbf16>
    %c0_1 = arith.constant 0 : index
    %c0_2 = arith.constant 0 : index
    %1 = vector.load %arg2[%c0_1, %c0_2] : memref<32x1024xbf16, #tpu.memory_space<vmem>>, vector<32x1024xbf16>
    %cst = arith.constant dense<0.000000e+00> : vector<8x1024xf32>
    %2 = tpu.matmul %0, %1, %cst {dimension_numbers = #tpu.dot_dimension_numbers<[1], [0], [0], [1], [0, 0, 1, 1], [], []>} : vector<8x32xbf16>, vector<32x1024xbf16>, vector<8x1024xf32> -> vector<8x1024xf32>
    %c0_3 = arith.constant 0 : index
    %c0_4 = arith.constant 0 : index
    %3 = vector.load %arg3[%c0_3, %c0_4] : memref<1x1024xf32, #tpu.memory_space<vmem>>, vector<1x1024xf32>
    %4 = vector.broadcast %3 : vector<1x1024xf32> to vector<8x1024xf32>
    %5 = arith.addf %2, %4 : vector<8x1024xf32>
    %6 = math.tanh %5 : vector<8x1024xf32>
    %7 = arith.truncf %6 : vector<8x1024xf32> to vector<8x1024xbf16>
    %c0_5 = arith.constant 0 : index
    %c0_6 = arith.constant 0 : index
    %8 = vector.load %arg4[%c0_5, %c0_6] : memref<1024x128xbf16, #tpu.memory_space<vmem>>, vector<1024x128xbf16>
    %cst_7 = arith.constant dense<0.000000e+00> : vector<8x128xf32>
    %9 = tpu.matmul %7, %8, %cst_7 {dimension_numbers = #tpu.dot_dimension_numbers<[1], [0], [0], [1], [0, 0, 1, 1], [], []>} : vector<8x1024xbf16>, vector<1024x128xbf16>, vector<8x128xf32> -> vector<8x128xf32>
    %c0_8 = arith.constant 0 : index
    %c0_9 = arith.constant 0 : index
    %10 = vector.load %arg5[%c0_8, %c0_9] : memref<1x128xf32, #tpu.memory_space<vmem>>, vector<1x128xf32>
    %11 = vector.broadcast %10 : vector<1x128xf32> to vector<8x128xf32>
    %12 = arith.addf %9, %11 : vector<8x128xf32>
    %c0_10 = arith.constant 0 : index
    %c0_11 = arith.constant 0 : index
    %13 = vector.load %arg6[%c0_10, %c0_11] : memref<8x128xf32, #tpu.memory_space<vmem>>, vector<8x128xf32>
    tpu.vector_store %arg6[%c0_10, %c0_11], %12 {strides = array<i32>} : memref<8x128xf32, #tpu.memory_space<vmem>>, vector<8x128xf32>,
    return
  }
  func.func @transform_0(%arg0: i32) -> (i32, i32) {
    %c0_i32 = arith.constant 0 : i32
    %c0_i32_0 = arith.constant 0 : i32
    return %arg0, %c0_i32 : i32, i32
  }
  func.func @transform_1(%arg0: i32) -> (i32, i32) {
    %c0_i32 = arith.constant 0 : i32
    %c0_i32_0 = arith.constant 0 : i32
    %c0_i32_1 = arith.constant 0 : i32
    return %c0_i32, %c0_i32_0 : i32, i32
  }
  func.func @transform_2(%arg0: i32) -> (i32, i32) {
    %c0_i32 = arith.constant 0 : i32
    %c0_i32_0 = arith.constant 0 : i32
    %c0_i32_1 = arith.constant 0 : i32
    return %c0_i32, %c0_i32_0 : i32, i32
  }
  func.func @transform_3(%arg0: i32) -> (i32, i32) {
    %c0_i32 = arith.constant 0 : i32
    %c0_i32_0 = arith.constant 0 : i32
    %c0_i32_1 = arith.constant 0 : i32
    return %c0_i32, %c0_i32_0 : i32, i32
  }
  func.func @transform_4(%arg0: i32) -> (i32, i32) {
    %c0_i32 = arith.constant 0 : i32
    %c0_i32_0 = arith.constant 0 : i32
    %c0_i32_1 = arith.constant 0 : i32
    return %c0_i32, %c0_i32_0 : i32, i32
  }
  func.func @transform_5(%arg0: i32) -> (i32, i32) {
    %c0_i32 = arith.constant 0 : i32
    %c0_i32_0 = arith.constant 0 : i32
    return %arg0, %c0_i32 : i32, i32
  }
}

</mosaic_0001>

<llo_original>
// kernel: tpu_custom_call.1
$region0: #{tpu_custom_call.1}
  #allocation0 [shape = 'u32[]', space=smem, size = 0x4, offset = 0x4, fixed_abs, tag = 'smem constant byte address 0x4 - core index']
  #allocation1 [shape = 'u32[144,128]{1,0:T(1,128)}', space=vmem, size = 0x12000, scoped, tag = 'internal scratch']
  %s0 = inlined_call_operand.hbm [shape: bf16[8,32], index: 0, kind: input, shape index: {}]
  %s1 = inlined_call_operand.hbm [shape: bf16[32,1024], index: 1, kind: input, shape index: {}]
  %s2 = inlined_call_operand.hbm [shape: f32[1,1024], index: 2, kind: input, shape index: {}]
  %s3 = inlined_call_operand.hbm [shape: bf16[1024,128], index: 3, kind: input, shape index: {}]
  %s4 = inlined_call_operand.vmem [shape: f32[1,128], index: 4, kind: input, shape index: {}]
  %s5 = inlined_call_operand.hbm [shape: f32[8,128], index: 5, kind: output, shape index: {}]
  %s6 = sld [smem:[#allocation0]]
  $region46: #{tpu_custom_call.1} parent=0
    _
  %s8 = ssub.s32 1, %s6
  %s9 = scalar_select 0, %s8, %s6
  $region1: #{tpu_custom_call.1} parent=0
    #allocation2 [shape = 'u8[2048]{0}', space=vmem, size = 0x800, scoped, tag = 'input window, operand 0, single buffered']
    #allocation3 [shape = 's32[1]{0}', space=sflag, size = 0x4, scoped, tag = 'scoped memory for tpu_custom_call.1']
    #allocation4 [shape = 's32[1]{0}', space=sflag, size = 0x4, scoped, tag = 'scoped memory for tpu_custom_call.1']
    #allocation5 [shape = 'u8[65536]{0}', space=vmem, size = 0x10000, scoped, tag = 'input window, operand 1, single buffered']
    #allocation6 [shape = 's32[1]{0}', space=sflag, size = 0x4, scoped, tag = 'scoped memory for tpu_custom_call.1']
    #allocation7 [shape = 'u8[4096]{0}', space=vmem, size = 0x1000, scoped, tag = 'input window, operand 2, single buffered']
    #allocation8 [shape = 'u8[262144]{0}', space=vmem, size = 0x40000, scoped, tag = 'input window, operand 3, single buffered']
    #allocation9 [shape = 's32[1]{0}', space=sflag, size = 0x4, scoped, tag = 'scoped memory for tpu_custom_call.1']
    #allocation10 [shape = 'u8[4096]{0}', space=vmem, size = 0x1000, scoped, tag = 'output window, operand 0, single buffered']
    %10 = vsyncpa [#allocation3], 0
    %11 = vsyncpa [#allocation6], 0
    %12 = vsyncpa [#allocation9], 0
    %13 = vsyncpa [#allocation4], 0
    // Predicated region
    $region2: #{tpu_custom_call.1} parent=1 // pred_check
      _
    $region3: #{tpu_custom_call.1} parent=1 // pred_check_branch
      %15 = sbr.rel (0) target = $region5
    $region4: #{tpu_custom_call.1} parent=1 // pred_region
      %s17 = ssub.s32 64, 64
      %18 = vsyncadd [#allocation3], %s17
      %s20 = sshll.u32 [#allocation2], 4
      %s21 = int_to_ptr.vmem [resolvable:$true] %s20
      %23 = dma.hbm_to_vmem [thread:$0]  %s0, 64, %s21, [#allocation3]
    $region5: #{tpu_custom_call.1} parent=1 // pred_fallthru
      _
    // Predicated region
    $region6: #{tpu_custom_call.1} parent=1 // pred_check
      _
    $region7: #{tpu_custom_call.1} parent=1 // pred_check_branch
      %25 = sbr.rel (0) target = $region9
    $region8: #{tpu_custom_call.1} parent=1 // pred_region
      %s27 = ssub.s32 2048, 2048
      %28 = vsyncadd [#allocation6], %s27
      %s29 = sshll.u32 [#allocation5], 4
      %s30 = int_to_ptr.vmem [resolvable:$true] %s29
      %35 = dma.hbm_to_vmem [thread:$0]  %s1, 2048, %s30, [#allocation6], 512, 512, 32
    $region9: #{tpu_custom_call.1} parent=1 // pred_fallthru
      _
    // Predicated region
    $region10: #{tpu_custom_call.1} parent=1 // pred_check
      _
    $region11: #{tpu_custom_call.1} parent=1 // pred_check_branch
      %37 = sbr.rel (0) target = $region13
    $region12: #{tpu_custom_call.1} parent=1 // pred_region
      %s39 = ssub.s32 128, 128
      %40 = vsyncadd [#allocation6], %s39
      %s42 = sshll.u32 [#allocation7], 4
      %s43 = int_to_ptr.vmem [resolvable:$true] %s42
      %45 = dma.hbm_to_vmem [thread:$0]  %s2, 128, %s43, [#allocation6]
    $region13: #{tpu_custom_call.1} parent=1 // pred_fallthru
      _
    // Predicated region
    $region14: #{tpu_custom_call.1} parent=1 // pred_check
      _
    $region15: #{tpu_custom_call.1} parent=1 // pred_check_branch
      %47 = sbr.rel (0) target = $region17
    $region16: #{tpu_custom_call.1} parent=1 // pred_region
      %s49 = ssub.s32 8192, 8192
      %50 = vsyncadd [#allocation9], %s49
      %s51 = sshll.u32 [#allocation8], 4
      %s52 = int_to_ptr.vmem [resolvable:$true] %s51
      %57 = dma.hbm_to_vmem [thread:$0]  %s3, 8192, %s52, [#allocation9], 64, 64, 4
    $region17: #{tpu_custom_call.1} parent=1 // pred_fallthru
      _
    // Predicated region
    $region18: #{tpu_custom_call.1} parent=1 // pred_check
      _
    $region19: #{tpu_custom_call.1} parent=1 // pred_check_branch
      %59 = sbr.rel (0) target = $region21
    $region20: #{tpu_custom_call.1} parent=1 // pred_region
      _
    $region21: #{tpu_custom_call.1} parent=1 // pred_fallthru
      _
    // Predicated region
    $region22: #{tpu_custom_call.1} parent=1 // pred_check
      _
    $region23: #{tpu_custom_call.1} parent=1 // pred_check_branch
      %61 = sbr.rel (0) target = $region25
    $region24: #{tpu_custom_call.1} parent=1 // pred_region
      %62 = dma.done [#allocation3], 64
    $region25: #{tpu_custom_call.1} parent=1 // pred_fallthru
      _
    // Predicated region
    $region26: #{tpu_custom_call.1} parent=1 // pred_check
      _
    $region27: #{tpu_custom_call.1} parent=1 // pred_check_branch
      %64 = sbr.rel (0) target = $region29
    $region28: #{tpu_custom_call.1} parent=1 // pred_region
      %65 = dma.done [#allocation6], 2048
    $region29: #{tpu_custom_call.1} parent=1 // pred_fallthru
      _
    // Predicated region
    $region30: #{tpu_custom_call.1} parent=1 // pred_check
      _
    $region31: #{tpu_custom_call.1} parent=1 // pred_check_branch
      %67 = sbr.rel (0) target = $region33
    $region32: #{tpu_custom_call.1} parent=1 // pred_region
      %68 = dma.done [#allocation6], 128
    $region33: #{tpu_custom_call.1} parent=1 // pred_fallthru
      _
    // Predicated region
    $region34: #{tpu_custom_call.1} parent=1 // pred_check
      _
    $region35: #{tpu_custom_call.1} parent=1 // pred_check_branch
      %70 = sbr.rel (0) target = $region37
    $region36: #{tpu_custom_call.1} parent=1 // pred_region
      %71 = dma.done [#allocation9], 8192
    $region37: #{tpu_custom_call.1} parent=1 // pred_fallthru
      _
    %v73 = vld [vmem:[#allocation2] sm:$0xf]
    %v74 = vld [vmem:[#allocation5] sm:$0xff]
    %v75 = vld [vmem:[#allocation5 + $0x8] sm:$0xff]
    %v76 = vld [vmem:[#allocation5 + $0x10] sm:$0xff]
    %v77 = vld [vmem:[#allocation5 + $0x18] sm:$0xff]
    %v78 = vld [vmem:[#allocation5 + $0x20] sm:$0xff]
    %v79 = vld [vmem:[#allocation5 + $0x28] sm:$0xff]
    %v80 = vld [vmem:[#allocation5 + $0x30] sm:$0xff]
    %v81 = vld [vmem:[#allocation5 + $0x38] sm:$0xff]
    %v82 = vld [vmem:[#allocation5 + $0x40] sm:$0xff]
    %v83 = vld [vmem:[#allocation5 + $0x48] sm:$0xff]
    %v84 = vld [vmem:[#allocation5 + $0x50] sm:$0xff]
    %v85 = vld [vmem:[#allocation5 + $0x58] sm:$0xff]
    %v86 = vld [vmem:[#allocation5 + $0x60] sm:$0xff]
    %v87 = vld [vmem:[#allocation5 + $0x68] sm:$0xff]
    %v88 = vld [vmem:[#allocation5 + $0x70] sm:$0xff]
    %v89 = vld [vmem:[#allocation5 + $0x78] sm:$0xff]
    %v90 = vld [vmem:[#allocation7] sm:$0xff]
    %v92 = vlaneseq
    %v93 = vshrl.u32 %v92, 7
    %v94 = vsub.s32 0, %v93
    %v95 = vrot.slane %v90, %v94
    %v96 = vlaneseq
    %v97 = vshrl.u32 %v96, 7
    %v98 = vsub.s32 1, %v97
    %v99 = vrot.slane %v90, %v98
    %v100 = vlaneseq
    %v101 = vshrl.u32 %v100, 7
    %v102 = vsub.s32 2, %v101
    %v103 = vrot.slane %v90, %v102
    %v104 = vlaneseq
    %v105 = vshrl.u32 %v104, 7
    %v106 = vsub.s32 3, %v105
    %v107 = vrot.slane %v90, %v106
    %v108 = vlaneseq
    %v109 = vshrl.u32 %v108, 7
    %v110 = vsub.s32 4, %v109
    %v111 = vrot.slane %v90, %v110
    %v112 = vlaneseq
    %v113 = vshrl.u32 %v112, 7
    %v114 = vsub.s32 5, %v113
    %v115 = vrot.slane %v90, %v114
    %v116 = vlaneseq
    %v117 = vshrl.u32 %v116, 7
    %v118 = vsub.s32 6, %v117
    %v119 = vrot.slane %v90, %v118
    %v120 = vlaneseq
    %v121 = vshrl.u32 %v120, 7
    %v122 = vsub.s32 7, %v121
    %v123 = vrot.slane %v90, %v122
    %v148 = vunpack.c.l.b16 %v74
    %v149 = vunpack.c.h.b16 %v74
    %v150 = vunpack.c.l.b16 %v75
    %v151 = vunpack.c.h.b16 %v75
    %v152 = vunpack.c.l.b16 %v76
    %v153 = vunpack.c.h.b16 %v76
    %v154 = vunpack.c.l.b16 %v77
    %v155 = vunpack.c.h.b16 %v77
    %v156 = vunpack.c.l.b16 %v78
    %v157 = vunpack.c.h.b16 %v78
    %v158 = vunpack.c.l.b16 %v79
    %v159 = vunpack.c.h.b16 %v79
    %v160 = vunpack.c.l.b16 %v80
    %v161 = vunpack.c.h.b16 %v80
    %v162 = vunpack.c.l.b16 %v81
    %v163 = vunpack.c.h.b16 %v81
    %v164 = vunpack.c.l.b16 %v82
    %v165 = vunpack.c.h.b16 %v82
    %v166 = vunpack.c.l.b16 %v83
    %v167 = vunpack.c.h.b16 %v83
    %v168 = vunpack.c.l.b16 %v84
    %v169 = vunpack.c.h.b16 %v84
    %v170 = vunpack.c.l.b16 %v85
    %v171 = vunpack.c.h.b16 %v85
    %v172 = vunpack.c.l.b16 %v86
    %v173 = vunpack.c.h.b16 %v86
    %v174 = vunpack.c.l.b16 %v87
    %v175 = vunpack.c.h.b16 %v87
    %v176 = vunpack.c.l.b16 %v88
    %v177 = vunpack.c.h.b16 %v88
    %v178 = vunpack.c.l.b16 %v89
    %v179 = vunpack.c.h.b16 %v89
    %v180 = vpack.c.b16 %v156, %v148
    %v181 = vpack.c.b16 %v157, %v149
    %v182 = vpack.c.b16 %v158, %v150
    %v183 = vpack.c.b16 %v159, %v151
    %v184 = vpack.c.b16 %v160, %v152
    %v185 = vpack.c.b16 %v161, %v153
    %v186 = vpack.c.b16 %v162, %v154
    %v187 = vpack.c.b16 %v163, %v155
    %v188 = vpack.c.b16 %v172, %v164
    %v189 = vpack.c.b16 %v173, %v165
    %v190 = vpack.c.b16 %v174, %v166
    %v191 = vpack.c.b16 %v175, %v167
    %v192 = vpack.c.b16 %v176, %v168
    %v193 = vpack.c.b16 %v177, %v169
    %v194 = vpack.c.b16 %v178, %v170
    %v195 = vpack.c.b16 %v179, %v171
    %vm212 = vcmask 261120
    %v214 = vsel %vm212, %v73, 0
    %216 = vmatprep.subr.bf16.mxu0 %v181
    %217 = vmatpush1.bf16.msra.mxu0 %v180
    %218 = vmatprep.subr.bf16.mxu0 %v189
    %219 = vmatpush1.bf16.msra.mxu0 %v188
    %220 = vmatprep.subr.bf16.mxu0 0
    %221 = vmatpush1.bf16.msra.mxu0 0
    %222 = vmatprep.subr.bf16.mxu0 0
    %223 = vmatpush1.bf16.msra.mxu0 0
    %224 = vmatprep.subr.bf16.mxu0 0
    %225 = vmatpush1.bf16.msra.mxu0 0
    %226 = vmatprep.subr.bf16.mxu0 0
    %227 = vmatpush1.bf16.msra.mxu0 0
    %228 = vmatprep.subr.bf16.mxu0 0
    %229 = vmatpush1.bf16.msra.mxu0 0
    %230 = vmatprep.subr.bf16.mxu0 0
    %231 = vmatpush1.bf16.msra.mxu0 0
    %232 = vmatprep.subr.bf16.mxu0 0
    %233 = vmatpush1.bf16.msra.mxu0 0
    %234 = vmatprep.subr.bf16.mxu0 0
    %235 = vmatpush1.bf16.msra.mxu0 0
    %236 = vmatprep.subr.bf16.mxu0 0
    %237 = vmatpush1.bf16.msra.mxu0 0
    %238 = vmatprep.subr.bf16.mxu0 0
    %239 = vmatpush1.bf16.msra.mxu0 0
    %240 = vmatprep.subr.bf16.mxu0 0
    %241 = vmatpush1.bf16.msra.mxu0 0
    %242 = vmatprep.subr.bf16.mxu0 0
    %243 = vmatpush1.bf16.msra.mxu0 0
    %244 = vmatprep.subr.bf16.mxu0 0
    %245 = vmatpush1.bf16.msra.mxu0 0
    %246 = vmatprep.subr.bf16.mxu0 0
    %247 = vmatpush1.bf16.msra.mxu0 0
    %248 = vmatprep.mubr.bf16.mxu0 0
    %249 = vmatmul.mubr.bf16.gmra.mrb[0].mxu0 %v214
    %v250 = vpop.f32.mrb[0].mxu0
    %v251 = vadd.f32 %v95, %v250
    %v252 = vpop.f32.mrb[0].mxu0
    %v253 = vadd.f32 %v99, %v252
    %v254 = vpop.f32.mrb[0].mxu0
    %v255 = vpop.f32.mrb[0].mxu0
    %256 = vdwg.mxu0
    %257 = vmatprep.subr.bf16.mxu0 %v183
    %258 = vmatpush1.bf16.msra.mxu0 %v182
    %259 = vmatprep.subr.bf16.mxu0 %v191
    %260 = vmatpush1.bf16.msra.mxu0 %v190
    %261 = vmatprep.subr.bf16.mxu0 0
    %262 = vmatpush1.bf16.msra.mxu0 0
    %263 = vmatprep.subr.bf16.mxu0 0
    %264 = vmatpush1.bf16.msra.mxu0 0
    %265 = vmatprep.subr.bf16.mxu0 0
    %266 = vmatpush1.bf16.msra.mxu0 0
    %267 = vmatprep.subr.bf16.mxu0 0
    %268 = vmatpush1.bf16.msra.mxu0 0
    %269 = vmatprep.subr.bf16.mxu0 0
    %270 = vmatpush1.bf16.msra.mxu0 0
    %271 = vmatprep.subr.bf16.mxu0 0
    %272 = vmatpush1.bf16.msra.mxu0 0
    %273 = vmatprep.subr.bf16.mxu0 0
    %274 = vmatpush1.bf16.msra.mxu0 0
    %275 = vmatprep.subr.bf16.mxu0 0
    %276 = vmatpush1.bf16.msra.mxu0 0
    %277 = vmatprep.subr.bf16.mxu0 0
    %278 = vmatpush1.bf16.msra.mxu0 0
    %279 = vmatprep.subr.bf16.mxu0 0
    %280 = vmatpush1.bf16.msra.mxu0 0
    %281 = vmatprep.subr.bf16.mxu0 0
    %282 = vmatpush1.bf16.msra.mxu0 0
    %283 = vmatprep.subr.bf16.mxu0 0
    %284 = vmatpush1.bf16.msra.mxu0 0
    %285 = vmatprep.subr.bf16.mxu0 0
    %286 = vmatpush1.bf16.msra.mxu0 0
    %287 = vmatprep.subr.bf16.mxu0 0
    %288 = vmatpush1.bf16.msra.mxu0 0
    %289 = vmatprep.mubr.bf16.mxu0 0
    %290 = vmatmul.mubr.bf16.gmra.mrb[0].mxu0 %v214
    %v291 = vpop.f32.mrb[0].mxu0
    %v292 = vadd.f32 %v103, %v291
    %v293 = vpop.f32.mrb[0].mxu0
    %v294 = vadd.f32 %v107, %v293
    %v295 = vpop.f32.mrb[0].mxu0
    %v296 = vpop.f32.mrb[0].mxu0
    %297 = vdwg.mxu0
    %298 = vmatprep.subr.bf16.mxu0 %v185
    %299 = vmatpush1.bf16.msra.mxu0 %v184
    %300 = vmatprep.subr.bf16.mxu0 %v193
    %301 = vmatpush1.bf16.msra.mxu0 %v192
    %302 = vmatprep.subr.bf16.mxu0 0
    %303 = vmatpush1.bf16.msra.mxu0 0
    %304 = vmatprep.subr.bf16.mxu0 0
    %305 = vmatpush1.bf16.msra.mxu0 0
    %306 = vmatprep.subr.bf16.mxu0 0
    %307 = vmatpush1.bf16.msra.mxu0 0
    %308 = vmatprep.subr.bf16.mxu0 0
    %309 = vmatpush1.bf16.msra.mxu0 0
    %310 = vmatprep.subr.bf16.mxu0 0
    %311 = vmatpush1.bf16.msra.mxu0 0
    %312 = vmatprep.subr.bf16.mxu0 0
    %313 = vmatpush1.bf16.msra.mxu0 0
    %314 = vmatprep.subr.bf16.mxu0 0
    %315 = vmatpush1.bf16.msra.mxu0 0
    %316 = vmatprep.subr.bf16.mxu0 0
    %317 = vmatpush1.bf16.msra.mxu0 0
    %318 = vmatprep.subr.bf16.mxu0 0
    %319 = vmatpush1.bf16.msra.mxu0 0
    %320 = vmatprep.subr.bf16.mxu0 0
    %321 = vmatpush1.bf16.msra.mxu0 0
    %322 = vmatprep.subr.bf16.mxu0 0
    %323 = vmatpush1.bf16.msra.mxu0 0
    %324 = vmatprep.subr.bf16.mxu0 0
    %325 = vmatpush1.bf16.msra.mxu0 0
    %326 = vmatprep.subr.bf16.mxu0 0
    %327 = vmatpush1.bf16.msra.mxu0 0
    %328 = vmatprep.subr.bf16.mxu0 0
    %329 = vmatpush1.bf16.msra.mxu0 0
    %330 = vmatprep.mubr.bf16.mxu0 0
    %331 = vmatmul.mubr.bf16.gmra.mrb[0].mxu0 %v214
    %v332 = vpop.f32.mrb[0].mxu0
    %v333 = vadd.f32 %v111, %v332
    %v334 = vpop.f32.mrb[0].mxu0
    %v335 = vadd.f32 %v115, %v334
    %v336 = vpop.f32.mrb[0].mxu0
    %v337 = vpop.f32.mrb[0].mxu0
    %338 = vdwg.mxu0
    %339 = vmatprep.subr.bf16.mxu0 %v187
    %340 = vmatpush1.bf16.msra.mxu0 %v186
    %341 = vmatprep.subr.bf16.mxu0 %v195
    %342 = vmatpush1.bf16.msra.mxu0 %v194
    %343 = vmatprep.subr.bf16.mxu0 0
    %344 = vmatpush1.bf16.msra.mxu0 0
    %345 = vmatprep.subr.bf16.mxu0 0
    %346 = vmatpush1.bf16.msra.mxu0 0
    %347 = vmatprep.subr.bf16.mxu0 0
    %348 = vmatpush1.bf16.msra.mxu0 0
    %349 = vmatprep.subr.bf16.mxu0 0
    %350 = vmatpush1.bf16.msra.mxu0 0
    %351 = vmatprep.subr.bf16.mxu0 0
    %352 = vmatpush1.bf16.msra.mxu0 0
    %353 = vmatprep.subr.bf16.mxu0 0
    %354 = vmatpush1.bf16.msra.mxu0 0
    %355 = vmatprep.subr.bf16.mxu0 0
    %356 = vmatpush1.bf16.msra.mxu0 0
    %357 = vmatprep.subr.bf16.mxu0 0
    %358 = vmatpush1.bf16.msra.mxu0 0
    %359 = vmatprep.subr.bf16.mxu0 0
    %360 = vmatpush1.bf16.msra.mxu0 0
    %361 = vmatprep.subr.bf16.mxu0 0
    %362 = vmatpush1.bf16.msra.mxu0 0
    %363 = vmatprep.subr.bf16.mxu0 0
    %364 = vmatpush1.bf16.msra.mxu0 0
    %365 = vmatprep.subr.bf16.mxu0 0
    %366 = vmatpush1.bf16.msra.mxu0 0
    %367 = vmatprep.subr.bf16.mxu0 0
    %368 = vmatpush1.bf16.msra.mxu0 0
    %369 = vmatprep.subr.bf16.mxu0 0
    %370 = vmatpush1.bf16.msra.mxu0 0
    %371 = vmatprep.mubr.bf16.mxu0 0
    %372 = vmatmul.mubr.bf16.gmra.mrb[0].mxu0 %v214
    %v373 = vpop.f32.mrb[0].mxu0
    %v374 = vadd.f32 %v119, %v373
    %v375 = vpop.f32.mrb[0].mxu0
    %v376 = vadd.f32 %v123, %v375
    %v377 = vpop.f32.mrb[0].mxu0
    %v378 = vpop.f32.mrb[0].mxu0
    %379 = vdwg.mxu0
    %v380 = vtanh.pop %v251
    %v381 = vtanh.pop %v253
    %v382 = vtanh.pop %v292
    %v383 = vtanh.pop %v294
    %v384 = vtanh.pop %v333
    %v385 = vtanh.pop %v335
    %v386 = vtanh.pop %v374
    %v387 = vtanh.pop %v376
    %v388 = vpack.c.bf16 %v380, %v380
    %v389 = vpack.c.bf16 %v381, %v381
    %v390 = vpack.c.bf16 %v382, %v382
    %v391 = vpack.c.bf16 %v383, %v383
    %v392 = vpack.c.bf16 %v384, %v384
    %v393 = vpack.c.bf16 %v385, %v385
    %v394 = vpack.c.bf16 %v386, %v386
    %v395 = vpack.c.bf16 %v387, %v387
    %v396 = vld [vmem:[#allocation8] sm:$0xf]
    %v397 = vld [vmem:[#allocation8 + $0x4] sm:$0xf]
    %v398 = vld [vmem:[#allocation8 + $0x8] sm:$0xf]
    %v399 = vld [vmem:[#allocation8 + $0xc] sm:$0xf]
    %v400 = vld [vmem:[#allocation8 + $0x10] sm:$0xf]
    %v401 = vld [vmem:[#allocation8 + $0x14] sm:$0xf]
    %v402 = vld [vmem:[#allocation8 + $0x18] sm:$0xf]
    %v403 = vld [vmem:[#allocation8 + $0x1c] sm:$0xf]
    %v404 = vld [vmem:[#allocation8 + $0x20] sm:$0xf]
    %v405 = vld [vmem:[#allocation8 + $0x24] sm:$0xf]
    %v406 = vld [vmem:[#allocation8 + $0x28] sm:$0xf]
    %v407 = vld [vmem:[#allocation8 + $0x2c] sm:$0xf]
    %v408 = vld [vmem:[#allocation8 + $0x30] sm:$0xf]
    %v409 = vld [vmem:[#allocation8 + $0x34] sm:$0xf]
    %v410 = vld [vmem:[#allocation8 + $0x38] sm:$0xf]
    %v411 = vld [vmem:[#allocation8 + $0x3c] sm:$0xf]
    %v412 = vld [vmem:[#allocation8 + $0x40] sm:$0xf]
    %v413 = vld [vmem:[#allocation8 + $0x44] sm:$0xf]
    %v414 = vld [vmem:[#allocation8 + $0x48] sm:$0xf]
    %v415 = vld [vmem:[#allocation8 + $0x4c] sm:$0xf]
    %v416 = vld [vmem:[#allocation8 + $0x50] sm:$0xf]
    %v417 = vld [vmem:[#allocation8 + $0x54] sm:$0xf]
    %v418 = vld [vmem:[#allocation8 + $0x58] sm:$0xf]
    %v419 = vld [vmem:[#allocation8 + $0x5c] sm:$0xf]
    %v420 = vld [vmem:[#allocation8 + $0x60] sm:$0xf]
    %v421 = vld [vmem:[#allocation8 + $0x64] sm:$0xf]
    %v422 = vld [vmem:[#allocation8 + $0x68] sm:$0xf]
    %v423 = vld [vmem:[#allocation8 + $0x6c] sm:$0xf]
    %v424 = vld [vmem:[#allocation8 + $0x70] sm:$0xf]
    %v425 = vld [vmem:[#allocation8 + $0x74] sm:$0xf]
    %v426 = vld [vmem:[#allocation8 + $0x78] sm:$0xf]
    %v427 = vld [vmem:[#allocation8 + $0x7c] sm:$0xf]
    %v428 = vld [vmem:[#allocation8 + $0x80] sm:$0xf]
    %v429 = vld [vmem:[#allocation8 + $0x84] sm:$0xf]
    %v430 = vld [vmem:[#allocation8 + $0x88] sm:$0xf]
    %v431 = vld [vmem:[#allocation8 + $0x8c] sm:$0xf]
    %v432 = vld [vmem:[#allocation8 + $0x90] sm:$0xf]
    %v433 = vld [vmem:[#allocation8 + $0x94] sm:$0xf]
    %v434 = vld [vmem:[#allocation8 + $0x98] sm:$0xf]
    %v435 = vld [vmem:[#allocation8 + $0x9c] sm:$0xf]
    %v436 = vld [vmem:[#allocation8 + $0xa0] sm:$0xf]
    %v437 = vld [vmem:[#allocation8 + $0xa4] sm:$0xf]
    %v438 = vld [vmem:[#allocation8 + $0xa8] sm:$0xf]
    %v439 = vld [vmem:[#allocation8 + $0xac] sm:$0xf]
    %v440 = vld [vmem:[#allocation8 + $0xb0] sm:$0xf]
    %v441 = vld [vmem:[#allocation8 + $0xb4] sm:$0xf]
    %v442 = vld [vmem:[#allocation8 + $0xb8] sm:$0xf]
    %v443 = vld [vmem:[#allocation8 + $0xbc] sm:$0xf]
    %v444 = vld [vmem:[#allocation8 + $0xc0] sm:$0xf]
    %v445 = vld [vmem:[#allocation8 + $0xc4] sm:$0xf]
    %v446 = vld [vmem:[#allocation8 + $0xc8] sm:$0xf]
    %v447 = vld [vmem:[#allocation8 + $0xcc] sm:$0xf]
    %v448 = vld [vmem:[#allocation8 + $0xd0] sm:$0xf]
    %v449 = vld [vmem:[#allocation8 + $0xd4] sm:$0xf]
    %v450 = vld [vmem:[#allocation8 + $0xd8] sm:$0xf]
    %v451 = vld [vmem:[#allocation8 + $0xdc] sm:$0xf]
    %v452 = vld [vmem:[#allocation8 + $0xe0] sm:$0xf]
    %v453 = vld [vmem:[#allocation8 + $0xe4] sm:$0xf]
    %v454 = vld [vmem:[#allocation8 + $0xe8] sm:$0xf]
    %v455 = vld [vmem:[#allocation8 + $0xec] sm:$0xf]
    %v456 = vld [vmem:[#allocation8 + $0xf0] sm:$0xf]
    %v457 = vld [vmem:[#allocation8 + $0xf4] sm:$0xf]
    %v458 = vld [vmem:[#allocation8 + $0xf8] sm:$0xf]
    %v459 = vld [vmem:[#allocation8 + $0xfc] sm:$0xf]
    %v460 = vld [vmem:[#allocation8 + $0x100] sm:$0xf]
    %v461 = vld [vmem:[#allocation8 + $0x104] sm:$0xf]
    %v462 = vld [vmem:[#allocation8 + $0x108] sm:$0xf]
    %v463 = vld [vmem:[#allocation8 + $0x10c] sm:$0xf]
    %v464 = vld [vmem:[#allocation8 + $0x110] sm:$0xf]
    %v465 = vld [vmem:[#allocation8 + $0x114] sm:$0xf]
    %v466 = vld [vmem:[#allocation8 + $0x118] sm:$0xf]
    %v467 = vld [vmem:[#allocation8 + $0x11c] sm:$0xf]
    %v468 = vld [vmem:[#allocation8 + $0x120] sm:$0xf]
    %v469 = vld [vmem:[#allocation8 + $0x124] sm:$0xf]
    %v470 = vld [vmem:[#allocation8 + $0x128] sm:$0xf]
    %v471 = vld [vmem:[#allocation8 + $0x12c] sm:$0xf]
    %v472 = vld [vmem:[#allocation8 + $0x130] sm:$0xf]
    %v473 = vld [vmem:[#allocation8 + $0x134] sm:$0xf]
    %v474 = vld [vmem:[#allocation8 + $0x138] sm:$0xf]
    %v475 = vld [vmem:[#allocation8 + $0x13c] sm:$0xf]
    %v476 = vld [vmem:[#allocation8 + $0x140] sm:$0xf]
    %v477 = vld [vmem:[#allocation8 + $0x144] sm:$0xf]
    %v478 = vld [vmem:[#allocation8 + $0x148] sm:$0xf]
    %v479 = vld [vmem:[#allocation8 + $0x14c] sm:$0xf]
    %v480 = vld [vmem:[#allocation8 + $0x150] sm:$0xf]
    %v481 = vld [vmem:[#allocation8 + $0x154] sm:$0xf]
    %v482 = vld [vmem:[#allocation8 + $0x158] sm:$0xf]
    %v483 = vld [vmem:[#allocation8 + $0x15c] sm:$0xf]
    %v484 = vld [vmem:[#allocation8 + $0x160] sm:$0xf]
    %v485 = vld [vmem:[#allocation8 + $0x164] sm:$0xf]
    %v486 = vld [vmem:[#allocation8 + $0x168] sm:$0xf]
    %v487 = vld [vmem:[#allocation8 + $0x16c] sm:$0xf]
    %v488 = vld [vmem:[#allocation8 + $0x170] sm:$0xf]
    %v489 = vld [vmem:[#allocation8 + $0x174] sm:$0xf]
    %v490 = vld [vmem:[#allocation8 + $0x178] sm:$0xf]
    %v491 = vld [vmem:[#allocation8 + $0x17c] sm:$0xf]
    %v492 = vld [vmem:[#allocation8 + $0x180] sm:$0xf]
    %v493 = vld [vmem:[#allocation8 + $0x184] sm:$0xf]
    %v494 = vld [vmem:[#allocation8 + $0x188] sm:$0xf]
    %v495 = vld [vmem:[#allocation8 + $0x18c] sm:$0xf]
    %v496 = vld [vmem:[#allocation8 + $0x190] sm:$0xf]
    %v497 = vld [vmem:[#allocation8 + $0x194] sm:$0xf]
    %v498 = vld [vmem:[#allocation8 + $0x198] sm:$0xf]
    %v499 = vld [vmem:[#allocation8 + $0x19c] sm:$0xf]
    %v500 = vld [vmem:[#allocation8 + $0x1a0] sm:$0xf]
    %v501 = vld [vmem:[#allocation8 + $0x1a4] sm:$0xf]
    %v502 = vld [vmem:[#allocation8 + $0x1a8] sm:$0xf]
    %v503 = vld [vmem:[#allocation8 + $0x1ac] sm:$0xf]
    %v504 = vld [vmem:[#allocation8 + $0x1b0] sm:$0xf]
    %v505 = vld [vmem:[#allocation8 + $0x1b4] sm:$0xf]
    %v506 = vld [vmem:[#allocation8 + $0x1b8] sm:$0xf]
    %v507 = vld [vmem:[#allocation8 + $0x1bc] sm:$0xf]
    %v508 = vld [vmem:[#allocation8 + $0x1c0] sm:$0xf]
    %v509 = vld [vmem:[#allocation8 + $0x1c4] sm:$0xf]
    %v510 = vld [vmem:[#allocation8 + $0x1c8] sm:$0xf]
    %v511 = vld [vmem:[#allocation8 + $0x1cc] sm:$0xf]
    %v512 = vld [vmem:[#allocation8 + $0x1d0] sm:$0xf]
    %v513 = vld [vmem:[#allocation8 + $0x1d4] sm:$0xf]
    %v514 = vld [vmem:[#allocation8 + $0x1d8] sm:$0xf]
    %v515 = vld [vmem:[#allocation8 + $0x1dc] sm:$0xf]
    %v516 = vld [vmem:[#allocation8 + $0x1e0] sm:$0xf]
    %v517 = vld [vmem:[#allocation8 + $0x1e4] sm:$0xf]
    %v518 = vld [vmem:[#allocation8 + $0x1e8] sm:$0xf]
    %v519 = vld [vmem:[#allocation8 + $0x1ec] sm:$0xf]
    %v520 = vld [vmem:[#allocation8 + $0x1f0] sm:$0xf]
    %v521 = vld [vmem:[#allocation8 + $0x1f4] sm:$0xf]
    %v522 = vld [vmem:[#allocation8 + $0x1f8] sm:$0xf]
    %v523 = vld [vmem:[#allocation8 + $0x1fc] sm:$0xf]
    %v524 = vld [vmem:[%s4] sm:$0x1]
    %v526 = vlaneseq
    %v527 = vshrl.u32 %v526, 7
    %v528 = vsub.s32 0, %v527
    %v529 = vrot.slane %v524, %v528
    %v659 = vunpack.c.l.b16 %v396
    %v660 = vunpack.c.l.b16 %v397
    %v661 = vunpack.c.l.b16 %v398
    %v662 = vunpack.c.l.b16 %v399
    %v663 = vunpack.c.l.b16 %v400
    %v664 = vunpack.c.l.b16 %v401
    %v665 = vunpack.c.l.b16 %v402
    %v666 = vunpack.c.l.b16 %v403
    %v667 = vunpack.c.l.b16 %v404
    %v668 = vunpack.c.l.b16 %v405
    %v669 = vunpack.c.l.b16 %v406
    %v670 = vunpack.c.l.b16 %v407
    %v671 = vunpack.c.l.b16 %v408
    %v672 = vunpack.c.l.b16 %v409
    %v673 = vunpack.c.l.b16 %v410
    %v674 = vunpack.c.l.b16 %v411
    %v675 = vunpack.c.l.b16 %v412
    %v676 = vunpack.c.l.b16 %v413
    %v677 = vunpack.c.l.b16 %v414
    %v678 = vunpack.c.l.b16 %v415
    %v679 = vunpack.c.l.b16 %v416
    %v680 = vunpack.c.l.b16 %v417
    %v681 = vunpack.c.l.b16 %v418
    %v682 = vunpack.c.l.b16 %v419
    %v683 = vunpack.c.l.b16 %v420
    %v684 = vunpack.c.l.b16 %v421
    %v685 = vunpack.c.l.b16 %v422
    %v686 = vunpack.c.l.b16 %v423
    %v687 = vunpack.c.l.b16 %v424
    %v688 = vunpack.c.l.b16 %v425
    %v689 = vunpack.c.l.b16 %v426
    %v690 = vunpack.c.l.b16 %v427
    %v691 = vunpack.c.l.b16 %v428
    %v692 = vunpack.c.l.b16 %v429
    %v693 = vunpack.c.l.b16 %v430
    %v694 = vunpack.c.l.b16 %v431
    %v695 = vunpack.c.l.b16 %v432
    %v696 = vunpack.c.l.b16 %v433
    %v697 = vunpack.c.l.b16 %v434
    %v698 = vunpack.c.l.b16 %v435
    %v699 = vunpack.c.l.b16 %v436
    %v700 = vunpack.c.l.b16 %v437
    %v701 = vunpack.c.l.b16 %v438
    %v702 = vunpack.c.l.b16 %v439
    %v703 = vunpack.c.l.b16 %v440
    %v704 = vunpack.c.l.b16 %v441
    %v705 = vunpack.c.l.b16 %v442
    %v706 = vunpack.c.l.b16 %v443
    %v707 = vunpack.c.l.b16 %v444
    %v708 = vunpack.c.l.b16 %v445
    %v709 = vunpack.c.l.b16 %v446
    %v710 = vunpack.c.l.b16 %v447
    %v711 = vunpack.c.l.b16 %v448
    %v712 = vunpack.c.l.b16 %v449
    %v713 = vunpack.c.l.b16 %v450
    %v714 = vunpack.c.l.b16 %v451
    %v715 = vunpack.c.l.b16 %v452
    %v716 = vunpack.c.l.b16 %v453
    %v717 = vunpack.c.l.b16 %v454
    %v718 = vunpack.c.l.b16 %v455
    %v719 = vunpack.c.l.b16 %v456
    %v720 = vunpack.c.l.b16 %v457
    %v721 = vunpack.c.l.b16 %v458
    %v722 = vunpack.c.l.b16 %v459
    %v723 = vunpack.c.l.b16 %v460
    %v724 = vunpack.c.l.b16 %v461
    %v725 = vunpack.c.l.b16 %v462
    %v726 = vunpack.c.l.b16 %v463
    %v727 = vunpack.c.l.b16 %v464
    %v728 = vunpack.c.l.b16 %v465
    %v729 = vunpack.c.l.b16 %v466
    %v730 = vunpack.c.l.b16 %v467
    %v731 = vunpack.c.l.b16 %v468
    %v732 = vunpack.c.l.b16 %v469
    %v733 = vunpack.c.l.b16 %v470
    %v734 = vunpack.c.l.b16 %v471
    %v735 = vunpack.c.l.b16 %v472
    %v736 = vunpack.c.l.b16 %v473
    %v737 = vunpack.c.l.b16 %v474
    %v738 = vunpack.c.l.b16 %v475
    %v739 = vunpack.c.l.b16 %v476
    %v740 = vunpack.c.l.b16 %v477
    %v741 = vunpack.c.l.b16 %v478
    %v742 = vunpack.c.l.b16 %v479
    %v743 = vunpack.c.l.b16 %v480
    %v744 = vunpack.c.l.b16 %v481
    %v745 = vunpack.c.l.b16 %v482
    %v746 = vunpack.c.l.b16 %v483
    %v747 = vunpack.c.l.b16 %v484
    %v748 = vunpack.c.l.b16 %v485
    %v749 = vunpack.c.l.b16 %v486
    %v750 = vunpack.c.l.b16 %v487
    %v751 = vunpack.c.l.b16 %v488
    %v752 = vunpack.c.l.b16 %v489
    %v753 = vunpack.c.l.b16 %v490
    %v754 = vunpack.c.l.b16 %v491
    %v755 = vunpack.c.l.b16 %v492
    %v756 = vunpack.c.l.b16 %v493
    %v757 = vunpack.c.l.b16 %v494
    %v758 = vunpack.c.l.b16 %v495
    %v759 = vunpack.c.l.b16 %v496
    %v760 = vunpack.c.l.b16 %v497
    %v761 = vunpack.c.l.b16 %v498
    %v762 = vunpack.c.l.b16 %v499
    %v763 = vunpack.c.l.b16 %v500
    %v764 = vunpack.c.l.b16 %v501
    %v765 = vunpack.c.l.b16 %v502
    %v766 = vunpack.c.l.b16 %v503
    %v767 = vunpack.c.l.b16 %v504
    %v768 = vunpack.c.l.b16 %v505
    %v769 = vunpack.c.l.b16 %v506
    %v770 = vunpack.c.l.b16 %v507
    %v771 = vunpack.c.l.b16 %v508
    %v772 = vunpack.c.l.b16 %v509
    %v773 = vunpack.c.l.b16 %v510
    %v774 = vunpack.c.l.b16 %v511
    %v775 = vunpack.c.l.b16 %v512
    %v776 = vunpack.c.l.b16 %v513
    %v777 = vunpack.c.l.b16 %v514
    %v778 = vunpack.c.l.b16 %v515
    %v779 = vunpack.c.l.b16 %v516
    %v780 = vunpack.c.l.b16 %v517
    %v781 = vunpack.c.l.b16 %v518
    %v782 = vunpack.c.l.b16 %v519
    %v783 = vunpack.c.l.b16 %v520
    %v784 = vunpack.c.l.b16 %v521
    %v785 = vunpack.c.l.b16 %v522
    %v786 = vunpack.c.l.b16 %v523
    %v787 = vpack.c.b16 %v660, %v659
    %v788 = vpack.c.b16 %v662, %v661
    %v789 = vpack.c.b16 %v664, %v663
    %v790 = vpack.c.b16 %v666, %v665
    %v791 = vpack.c.b16 %v668, %v667
    %v792 = vpack.c.b16 %v670, %v669
    %v793 = vpack.c.b16 %v672, %v671
    %v794 = vpack.c.b16 %v674, %v673
    %v795 = vpack.c.b16 %v676, %v675
    %v796 = vpack.c.b16 %v678, %v677
    %v797 = vpack.c.b16 %v680, %v679
    %v798 = vpack.c.b16 %v682, %v681
    %v799 = vpack.c.b16 %v684, %v683
    %v800 = vpack.c.b16 %v686, %v685
    %v801 = vpack.c.b16 %v688, %v687
    %v802 = vpack.c.b16 %v690, %v689
    %v803 = vpack.c.b16 %v692, %v691
    %v804 = vpack.c.b16 %v694, %v693
    %v805 = vpack.c.b16 %v696, %v695
    %v806 = vpack.c.b16 %v698, %v697
    %v807 = vpack.c.b16 %v700, %v699
    %v808 = vpack.c.b16 %v702, %v701
    %v809 = vpack.c.b16 %v704, %v703
    %v810 = vpack.c.b16 %v706, %v705
    %v811 = vpack.c.b16 %v708, %v707
    %v812 = vpack.c.b16 %v710, %v709
    %v813 = vpack.c.b16 %v712, %v711
    %v814 = vpack.c.b16 %v714, %v713
    %v815 = vpack.c.b16 %v716, %v715
    %v816 = vpack.c.b16 %v718, %v717
    %v817 = vpack.c.b16 %v720, %v719
    %v818 = vpack.c.b16 %v722, %v721
    %v819 = vpack.c.b16 %v724, %v723
    %v820 = vpack.c.b16 %v726, %v725
    %v821 = vpack.c.b16 %v728, %v727
    %v822 = vpack.c.b16 %v730, %v729
    %v823 = vpack.c.b16 %v732, %v731
    %v824 = vpack.c.b16 %v734, %v733
    %v825 = vpack.c.b16 %v736, %v735
    %v826 = vpack.c.b16 %v738, %v737
    %v827 = vpack.c.b16 %v740, %v739
    %v828 = vpack.c.b16 %v742, %v741
    %v829 = vpack.c.b16 %v744, %v743
    %v830 = vpack.c.b16 %v746, %v745
    %v831 = vpack.c.b16 %v748, %v747
    %v832 = vpack.c.b16 %v750, %v749
    %v833 = vpack.c.b16 %v752, %v751
    %v834 = vpack.c.b16 %v754, %v753
    %v835 = vpack.c.b16 %v756, %v755
    %v836 = vpack.c.b16 %v758, %v757
    %v837 = vpack.c.b16 %v760, %v759
    %v838 = vpack.c.b16 %v762, %v761
    %v839 = vpack.c.b16 %v764, %v763
    %v840 = vpack.c.b16 %v766, %v765
    %v841 = vpack.c.b16 %v768, %v767
    %v842 = vpack.c.b16 %v770, %v769
    %v843 = vpack.c.b16 %v772, %v771
    %v844 = vpack.c.b16 %v774, %v773
    %v845 = vpack.c.b16 %v776, %v775
    %v846 = vpack.c.b16 %v778, %v777
    %v847 = vpack.c.b16 %v780, %v779
    %v848 = vpack.c.b16 %v782, %v781
    %v849 = vpack.c.b16 %v784, %v783
    %v850 = vpack.c.b16 %v786, %v785
    %915 = vmatprep.subr.bf16.mxu0 0
    %916 = vmatpush1.bf16.msra.mxu0 %v787
    %917 = vmatprep.subr.bf16.mxu0 0
    %918 = vmatpush1.bf16.msra.mxu0 %v788
    %919 = vmatprep.subr.bf16.mxu0 0
    %920 = vmatpush1.bf16.msra.mxu0 %v789
    %921 = vmatprep.subr.bf16.mxu0 0
    %922 = vmatpush1.bf16.msra.mxu0 %v790
    %923 = vmatprep.subr.bf16.mxu0 0
    %924 = vmatpush1.bf16.msra.mxu0 %v791
    %925 = vmatprep.subr.bf16.mxu0 0
    %926 = vmatpush1.bf16.msra.mxu0 %v792
    %927 = vmatprep.subr.bf16.mxu0 0
    %928 = vmatpush1.bf16.msra.mxu0 %v793
    %929 = vmatprep.subr.bf16.mxu0 0
    %930 = vmatpush1.bf16.msra.mxu0 %v794
    %931 = vmatprep.subr.bf16.mxu0 0
    %932 = vmatpush1.bf16.msra.mxu0 %v795
    %933 = vmatprep.subr.bf16.mxu0 0
    %934 = vmatpush1.bf16.msra.mxu0 %v796
    %935 = vmatprep.subr.bf16.mxu0 0
    %936 = vmatpush1.bf16.msra.mxu0 %v797
    %937 = vmatprep.subr.bf16.mxu0 0
    %938 = vmatpush1.bf16.msra.mxu0 %v798
    %939 = vmatprep.subr.bf16.mxu0 0
    %940 = vmatpush1.bf16.msra.mxu0 %v799
    %941 = vmatprep.subr.bf16.mxu0 0
    %942 = vmatpush1.bf16.msra.mxu0 %v800
    %943 = vmatprep.subr.bf16.mxu0 0
    %944 = vmatpush1.bf16.msra.mxu0 %v801
    %945 = vmatprep.subr.bf16.mxu0 0
    %946 = vmatpush1.bf16.msra.mxu0 %v802
    %947 = vmatprep.mubr.bf16.mxu0 %v389
    %948 = vmatmul.mubr.bf16.gmra.mrb[0].mxu0 %v388
    %v949 = vpop.f32.mrb[0].mxu0
    %v950 = vadd.f32 %v529, %v949
    %v951 = vpop.f32.mrb[0].mxu0
    %v952 = vpop.f32.mrb[0].mxu0
    %v953 = vpop.f32.mrb[0].mxu0
    %954 = vdwg.mxu0
    %955 = vmatprep.subr.bf16.mxu0 0
    %956 = vmatpush1.bf16.msra.mxu0 %v803
    %957 = vmatprep.subr.bf16.mxu0 0
    %958 = vmatpush1.bf16.msra.mxu0 %v804
    %959 = vmatprep.subr.bf16.mxu0 0
    %960 = vmatpush1.bf16.msra.mxu0 %v805
    %961 = vmatprep.subr.bf16.mxu0 0
    %962 = vmatpush1.bf16.msra.mxu0 %v806
    %963 = vmatprep.subr.bf16.mxu0 0
    %964 = vmatpush1.bf16.msra.mxu0 %v807
    %965 = vmatprep.subr.bf16.mxu0 0
    %966 = vmatpush1.bf16.msra.mxu0 %v808
    %967 = vmatprep.subr.bf16.mxu0 0
    %968 = vmatpush1.bf16.msra.mxu0 %v809
    %969 = vmatprep.subr.bf16.mxu0 0
    %970 = vmatpush1.bf16.msra.mxu0 %v810
    %971 = vmatprep.subr.bf16.mxu0 0
    %972 = vmatpush1.bf16.msra.mxu0 %v811
    %973 = vmatprep.subr.bf16.mxu0 0
    %974 = vmatpush1.bf16.msra.mxu0 %v812
    %975 = vmatprep.subr.bf16.mxu0 0
    %976 = vmatpush1.bf16.msra.mxu0 %v813
    %977 = vmatprep.subr.bf16.mxu0 0
    %978 = vmatpush1.bf16.msra.mxu0 %v814
    %979 = vmatprep.subr.bf16.mxu0 0
    %980 = vmatpush1.bf16.msra.mxu0 %v815
    %981 = vmatprep.subr.bf16.mxu0 0
    %982 = vmatpush1.bf16.msra.mxu0 %v816
    %983 = vmatprep.subr.bf16.mxu0 0
    %984 = vmatpush1.bf16.msra.mxu0 %v817
    %985 = vmatprep.subr.bf16.mxu0 0
    %986 = vmatpush1.bf16.msra.mxu0 %v818
    %987 = vmatprep.mubr.bf16.mxu0 %v391
    %988 = vmatmul.mubr.bf16.gmra.mrb[0].mxu0 %v390
    %v989 = vpop.f32.mrb[0].mxu0
    %v990 = vadd.f32 %v950, %v989
    %v991 = vpop.f32.mrb[0].mxu0
    %v992 = vpop.f32.mrb[0].mxu0
    %v993 = vpop.f32.mrb[0].mxu0
    %994 = vdwg.mxu0
    %995 = vmatprep.subr.bf16.mxu0 0
    %996 = vmatpush1.bf16.msra.mxu0 %v819
    %997 = vmatprep.subr.bf16.mxu0 0
    %998 = vmatpush1.bf16.msra.mxu0 %v820
    %999 = vmatprep.subr.bf16.mxu0 0
    %1000 = vmatpush1.bf16.msra.mxu0 %v821
    %1001 = vmatprep.subr.bf16.mxu0 0
    %1002 = vmatpush1.bf16.msra.mxu0 %v822
    %1003 = vmatprep.subr.bf16.mxu0 0
    %1004 = vmatpush1.bf16.msra.mxu0 %v823
    %1005 = vmatprep.subr.bf16.mxu0 0
    %1006 = vmatpush1.bf16.msra.mxu0 %v824
    %1007 = vmatprep.subr.bf16.mxu0 0
    %1008 = vmatpush1.bf16.msra.mxu0 %v825
    %1009 = vmatprep.subr.bf16.mxu0 0
    %1010 = vmatpush1.bf16.msra.mxu0 %v826
    %1011 = vmatprep.subr.bf16.mxu0 0
    %1012 = vmatpush1.bf16.msra.mxu0 %v827
    %1013 = vmatprep.subr.bf16.mxu0 0
    %1014 = vmatpush1.bf16.msra.mxu0 %v828
    %1015 = vmatprep.subr.bf16.mxu0 0
    %1016 = vmatpush1.bf16.msra.mxu0 %v829
    %1017 = vmatprep.subr.bf16.mxu0 0
    %1018 = vmatpush1.bf16.msra.mxu0 %v830
    %1019 = vmatprep.subr.bf16.mxu0 0
    %1020 = vmatpush1.bf16.msra.mxu0 %v831
    %1021 = vmatprep.subr.bf16.mxu0 0
    %1022 = vmatpush1.bf16.msra.mxu0 %v832
    %1023 = vmatprep.subr.bf16.mxu0 0
    %1024 = vmatpush1.bf16.msra.mxu0 %v833
    %1025 = vmatprep.subr.bf16.mxu0 0
    %1026 = vmatpush1.bf16.msra.mxu0 %v834
    %1027 = vmatprep.mubr.bf16.mxu0 %v393
    %1028 = vmatmul.mubr.bf16.gmra.mrb[0].mxu0 %v392
    %v1029 = vpop.f32.mrb[0].mxu0
    %v1030 = vadd.f32 %v990, %v1029
    %v1031 = vpop.f32.mrb[0].mxu0
    %v1032 = vpop.f32.mrb[0].mxu0
    %v1033 = vpop.f32.mrb[0].mxu0
    %1034 = vdwg.mxu0
    %1035 = vmatprep.subr.bf16.mxu0 0
    %1036 = vmatpush1.bf16.msra.mxu0 %v835
    %1037 = vmatprep.subr.bf16.mxu0 0
    %1038 = vmatpush1.bf16.msra.mxu0 %v836
    %1039 = vmatprep.subr.bf16.mxu0 0
    %1040 = vmatpush1.bf16.msra.mxu0 %v837
    %1041 = vmatprep.subr.bf16.mxu0 0
    %1042 = vmatpush1.bf16.msra.mxu0 %v838
    %1043 = vmatprep.subr.bf16.mxu0 0
    %1044 = vmatpush1.bf16.msra.mxu0 %v839
    %1045 = vmatprep.subr.bf16.mxu0 0
    %1046 = vmatpush1.bf16.msra.mxu0 %v840
    %1047 = vmatprep.subr.bf16.mxu0 0
    %1048 = vmatpush1.bf16.msra.mxu0 %v841
    %1049 = vmatprep.subr.bf16.mxu0 0
    %1050 = vmatpush1.bf16.msra.mxu0 %v842
    %1051 = vmatprep.subr.bf16.mxu0 0
    %1052 = vmatpush1.bf16.msra.mxu0 %v843
    %1053 = vmatprep.subr.bf16.mxu0 0
    %1054 = vmatpush1.bf16.msra.mxu0 %v844
    %1055 = vmatprep.subr.bf16.mxu0 0
    %1056 = vmatpush1.bf16.msra.mxu0 %v845
    %1057 = vmatprep.subr.bf16.mxu0 0
    %1058 = vmatpush1.bf16.msra.mxu0 %v846
    %1059 = vmatprep.subr.bf16.mxu0 0
    %1060 = vmatpush1.bf16.msra.mxu0 %v847
    %1061 = vmatprep.subr.bf16.mxu0 0
    %1062 = vmatpush1.bf16.msra.mxu0 %v848
    %1063 = vmatprep.subr.bf16.mxu0 0
    %1064 = vmatpush1.bf16.msra.mxu0 %v849
    %1065 = vmatprep.subr.bf16.mxu0 0
    %1066 = vmatpush1.bf16.msra.mxu0 %v850
    %1067 = vmatprep.mubr.bf16.mxu0 %v395
    %1068 = vmatmul.mubr.bf16.gmra.mrb[0].mxu0 %v394
    %v1069 = vpop.f32.mrb[0].mxu0
    %v1070 = vadd.f32 %v1030, %v1069
    %v1071 = vpop.f32.mrb[0].mxu0
    %v1072 = vpop.f32.mrb[0].mxu0
    %v1073 = vpop.f32.mrb[0].mxu0
    %1074 = vdwg.mxu0
    %1075 = vst [vmem:[#allocation10] sm:$0xff] %v1070
    // Predicated region
    $region38: #{tpu_custom_call.1} parent=1 // pred_check
      _
    $region39: #{tpu_custom_call.1} parent=1 // pred_check_branch
      %1077 = sbr.rel (0) target = $region41
    $region40: #{tpu_custom_call.1} parent=1 // pred_region
      %s1079 = ssub.s32 128, 128
      %1080 = vsyncadd [#allocation4], %s1079
      %s1082 = sshll.u32 [#allocation10], 4
      %s1083 = int_to_ptr.vmem [resolvable:$true] %s1082
      %1085 = dma.vmem_to_hbm [thread:$0]  %s1083, 128, %s5, [#allocation4]
    $region41: #{tpu_custom_call.1} parent=1 // pred_fallthru
      _
    // Predicated region
    $region42: #{tpu_custom_call.1} parent=1 // pred_check
      _
    $region43: #{tpu_custom_call.1} parent=1 // pred_check_branch
      %1087 = sbr.rel (0) target = $region45
    $region44: #{tpu_custom_call.1} parent=1 // pred_region
      %1088 = dma.done [#allocation4], 128
    $region45: #{tpu_custom_call.1} parent=1 // pred_fallthru
      _
    %1089 = vsyncpa [#allocation3], 1
    %1090 = vsyncpa [#allocation6], 1
    %1091 = vsyncpa [#allocation9], 1
    %1092 = vsyncpa [#allocation4], 1

</llo_original>
